<compile_context>
chip_gen: v7x
topology: tpu7x:2x2x1
jax: 0.10.0
libtpu: 0.0.40
codegen_flags: <defaults>
</compile_context>

<pallas_src>
import jax
import jax.numpy as jnp
from jax.experimental import pallas as pl
from jax.experimental.pallas import tpu as pltpu


BLOCK_N = 512  # lanes (batch elements) per grid step; multiple of 128


def lr_kernel(params_ref, x_ref, o_ref):
    """sigmoid(w0*x0 + w1*x1 + b) on one (2, BLOCK_N) tile of the batch.

    params_ref: (3,)          SMEM   -> [w0, w1, b] as scalars
    x_ref:      (2, BLOCK_N)  VMEM   -> row 0 = feature 0, row 1 = feature 1
    o_ref:      (1, BLOCK_N)  VMEM   -> lane-dense output
    """
    w0 = params_ref[0]
    w1 = params_ref[1]
    b = params_ref[2]
    x0 = x_ref[0:1, :]                      # (1, BLOCK_N)
    x1 = x_ref[1:2, :]                      # (1, BLOCK_N)
    z = x0 * w0 + x1 * w1 + b               # VPU FMA, scalar broadcast from SMEM
    o_ref[...] = jax.nn.sigmoid(z).astype(o_ref.dtype)   # exp/recip on EUP


def lr_forward(x, weight, bias, block_n=BLOCK_N):
    """x: (N, 2), weight: (1, 2) [torch nn.Linear layout], bias: (1,).

    Returns (N, 1) float32, matching the PyTorch module's output.
    """
    n = x.shape[0]
    x = x.astype(jnp.float32)
    weight = weight.astype(jnp.float32)
    bias = bias.astype(jnp.float32)

    # Lane-dense layout: features-major (2, N), padded so the last dim is a
    # multiple of the block width (keeps blocks (8,128)-legal, no masking).
    n_pad = pl.cdiv(n, block_n) * block_n
    xt = x.T                                 # (2, N)
    if n_pad != n:
        xt = jnp.pad(xt, ((0, 0), (0, n_pad - n)))

    # [w0, w1, b] as a tiny SMEM-resident scalar table.
    params = jnp.concatenate([weight.reshape(-1), bias.reshape(-1)])  # (3,)

    out = pl.pallas_call(
        lr_kernel,
        out_shape=jax.ShapeDtypeStruct((1, n_pad), jnp.float32),
        grid=(n_pad // block_n,),
        in_specs=[
            pl.BlockSpec(memory_space=pltpu.MemorySpace.SMEM),       # params
            pl.BlockSpec((2, block_n), lambda i: (0, i)),            # x tile
        ],
        out_specs=pl.BlockSpec((1, block_n), lambda i: (0, i)),
        compiler_params=pltpu.CompilerParams(
            dimension_semantics=("parallel",)),
    )(params, xt)

    # (1, n_pad) -> drop padding -> (N, 1) torch-shaped output.
    return out[:, :n].T


def lr_reference(x, weight, bias):
    """Pure-JAX reference: sigmoid(x @ W^T + b)."""
    return jax.nn.sigmoid(x.astype(jnp.float32) @ weight.T.astype(jnp.float32)
                          + bias.astype(jnp.float32)[None, :])


if __name__ == "__main__":
    key = jax.random.PRNGKey(0)
    kx, kw, kb, kx2 = jax.random.split(key, 4)

    # Small shapes consistent with the module: batch=8, in_features=2, out=1.
    N, IN, OUT = 8, 2, 1
    x = jax.random.normal(kx, (N, IN), dtype=jnp.float32)

    # Deterministic params (mirrors torch U(-1/sqrt(fan_in), +1/sqrt(fan_in))).
    bound = 1.0 / jnp.sqrt(jnp.float32(IN))
    weight = jax.random.uniform(kw, (OUT, IN), minval=-bound, maxval=bound,
                                dtype=jnp.float32)
    bias = jax.random.uniform(kb, (OUT,), minval=-bound, maxval=bound,
                              dtype=jnp.float32)

    out = jax.block_until_ready(lr_forward(x, weight, bias))
    ref = lr_reference(x, weight, bias)
    assert out.shape == (N, OUT), out.shape
    assert jnp.allclose(out, ref, atol=1e-5, rtol=1e-5), "mismatch (small N)"

    # Second check: batch not a multiple of the block width -> exercises the
    # multi-block grid + padding path.
    N2 = 1000
    x2 = jax.random.normal(kx2, (N2, IN), dtype=jnp.float32)
    out2 = jax.block_until_ready(lr_forward(x2, weight, bias))
    ref2 = lr_reference(x2, weight, bias)
    assert out2.shape == (N2, OUT), out2.shape
    assert jnp.allclose(out2, ref2, atol=1e-5, rtol=1e-5), "mismatch (tiled N)"

    print("KERNEL_OK")
</pallas_src>

<mosaic_0001>
module attributes {stable_mosaic.version = 11 : i64} {
  func.func @lr_kernel(%arg0: i32, %arg1: memref<3xf32, #tpu.memory_space<smem>>, %arg2: memref<2x512xf32, #tpu.memory_space<vmem>>, %arg3: memref<1x512xf32, #tpu.memory_space<vmem>>) attributes {dimension_semantics = [#tpu.dimension_semantics<parallel>], iteration_bounds = array<i64: 1>, scalar_prefetch = 0 : i64, scratch_operands = 0 : i64, tpu.core_type = #tpu.core_type<tc>, window_params = [{transform_indices = @transform_0, window_bounds = array<i64: 3>}, {transform_indices = @transform_1, window_bounds = array<i64: 2, 512>}, {transform_indices = @transform_2, window_bounds = array<i64: 1, 512>}]} {
    %c0 = arith.constant 0 : index
    %0 = memref.load %arg1[%c0] : memref<3xf32, #tpu.memory_space<smem>>
    %c1 = arith.constant 1 : index
    %1 = memref.load %arg1[%c1] : memref<3xf32, #tpu.memory_space<smem>>
    %c2 = arith.constant 2 : index
    %2 = memref.load %arg1[%c2] : memref<3xf32, #tpu.memory_space<smem>>
    %c0_0 = arith.constant 0 : index
    %c0_1 = arith.constant 0 : index
    %3 = vector.load %arg2[%c0_0, %c0_1] : memref<2x512xf32, #tpu.memory_space<vmem>>, vector<1x512xf32>
    %c1_2 = arith.constant 1 : index
    %c0_3 = arith.constant 0 : index
    %4 = vector.load %arg2[%c1_2, %c0_3] : memref<2x512xf32, #tpu.memory_space<vmem>>, vector<1x512xf32>
    %5 = vector.broadcast %0 : f32 to vector<1x512xf32>
    %6 = arith.mulf %3, %5 : vector<1x512xf32>
    %7 = vector.broadcast %1 : f32 to vector<1x512xf32>
    %8 = arith.mulf %4, %7 : vector<1x512xf32>
    %9 = arith.addf %6, %8 : vector<1x512xf32>
    %10 = vector.broadcast %2 : f32 to vector<1x512xf32>
    %11 = arith.addf %9, %10 : vector<1x512xf32>
    %12 = arith.negf %11 : vector<1x512xf32>
    %13 = math.exp %12 : vector<1x512xf32>
    %cst = arith.constant 1.000000e+00 : f32
    %14 = vector.broadcast %cst : f32 to vector<1x512xf32>
    %15 = arith.addf %14, %13 : vector<1x512xf32>
    %16 = arith.divf %14, %15 : vector<1x512xf32>
    %c0_4 = arith.constant 0 : index
    %c0_5 = arith.constant 0 : index
    %17 = vector.load %arg3[%c0_4, %c0_5] : memref<1x512xf32, #tpu.memory_space<vmem>>, vector<1x512xf32>
    tpu.vector_store %arg3[%c0_4, %c0_5], %16 {strides = array<i32>} : memref<1x512xf32, #tpu.memory_space<vmem>>, vector<1x512xf32>,
    return
  }
  func.func @transform_0(%arg0: i32) -> i32 {
    %c0_i32 = arith.constant 0 : i32
    %c0_i32_0 = arith.constant 0 : i32
    return %c0_i32 : i32
  }
  func.func @transform_1(%arg0: i32) -> (i32, i32) {
    %c0_i32 = arith.constant 0 : i32
    %c0_i32_0 = arith.constant 0 : i32
    return %c0_i32, %arg0 : i32, i32
  }
  func.func @transform_2(%arg0: i32) -> (i32, i32) {
    %c0_i32 = arith.constant 0 : i32
    %c0_i32_0 = arith.constant 0 : i32
    return %c0_i32, %arg0 : i32, i32
  }
}

</mosaic_0001>

<llo_original>
// kernel: tpu_custom_call.1
$region0: #{tpu_custom_call.1}
  #allocation0 [shape = 'u32[]', space=smem, size = 0x4, offset = 0x4, fixed_abs, tag = 'smem constant byte address 0x4 - core index']
  #allocation1 [shape = 'u32[144,128]{1,0:T(1,128)}', space=vmem, size = 0x12000, scoped, tag = 'internal scratch']
  %s0 = inlined_call_operand.hbm [shape: f32[3], index: 0, kind: input, shape index: {}]
  %s1 = inlined_call_operand.hbm [shape: f32[2,512], index: 1, kind: input, shape index: {}]
  %s2 = inlined_call_operand.hbm [shape: f32[1,512], index: 2, kind: output, shape index: {}]
  %s3 = sld [smem:[#allocation0]]
  $region26: #{tpu_custom_call.1} parent=0
    _
  %s5 = ssub.s32 1, %s3
  %s6 = scalar_select 0, %s5, %s3
  $region1: #{tpu_custom_call.1} parent=0
    #allocation2 [shape = 'u8[512]{0}', space=smem, size = 0x200, scoped, tag = 'input window, operand 0, single buffered']
    #allocation3 [shape = 's32[1]{0}', space=sflag, size = 0x4, scoped, tag = 'scoped memory for tpu_custom_call.1']
    #allocation4 [shape = 's32[1]{0}', space=sflag, size = 0x4, scoped, tag = 'scoped memory for tpu_custom_call.1']
    #allocation5 [shape = 's32[1]{0}', space=sflag, size = 0x4, scoped, tag = 'scoped memory for tpu_custom_call.1']
    #allocation6 [shape = 'u8[4096]{0}', space=vmem, size = 0x1000, scoped, tag = 'input window, operand 1, single buffered']
    #allocation7 [shape = 'u8[2048]{0}', space=vmem, size = 0x800, scoped, tag = 'output window, operand 0, single buffered']
    %7 = vsyncpa [#allocation5], 0
    %8 = vsyncpa [#allocation3], 0
    %9 = vsyncpa [#allocation4], 0
    // Predicated region
    $region2: #{tpu_custom_call.1} parent=1 // pred_check
      _
    $region3: #{tpu_custom_call.1} parent=1 // pred_check_branch
      %11 = sbr.rel (0) target = $region5
    $region4: #{tpu_custom_call.1} parent=1 // pred_region
      %s13 = ssub.s32 16, 16
      %14 = vsyncadd [#allocation5], %s13
      %17 = dma.hbm_to_smem %s0, 16, [#allocation2], [#allocation5]
    $region5: #{tpu_custom_call.1} parent=1 // pred_fallthru
      _
    // Predicated region
    $region6: #{tpu_custom_call.1} parent=1 // pred_check
      _
    $region7: #{tpu_custom_call.1} parent=1 // pred_check_branch
      %19 = sbr.rel (0) target = $region9
    $region8: #{tpu_custom_call.1} parent=1 // pred_region
      %s21 = ssub.s32 128, 128
      %22 = vsyncadd [#allocation3], %s21
      %s24 = sshll.u32 [#allocation6], 4
      %s25 = int_to_ptr.vmem [resolvable:$true] %s24
      %27 = dma.hbm_to_vmem [thread:$0]  %s1, 128, %s25, [#allocation3]
    $region9: #{tpu_custom_call.1} parent=1 // pred_fallthru
      _
    // Predicated region
    $region10: #{tpu_custom_call.1} parent=1 // pred_check
      _
    $region11: #{tpu_custom_call.1} parent=1 // pred_check_branch
      %29 = sbr.rel (0) target = $region13
    $region12: #{tpu_custom_call.1} parent=1 // pred_region
      %30 = dma.done [#allocation5], 16
    $region13: #{tpu_custom_call.1} parent=1 // pred_fallthru
      _
    // Predicated region
    $region14: #{tpu_custom_call.1} parent=1 // pred_check
      _
    $region15: #{tpu_custom_call.1} parent=1 // pred_check_branch
      %32 = sbr.rel (0) target = $region17
    $region16: #{tpu_custom_call.1} parent=1 // pred_region
      %33 = dma.done [#allocation3], 128
    $region17: #{tpu_custom_call.1} parent=1 // pred_fallthru
      _
    %34 = sfence
    %s35 = sld [smem:[#allocation2]]
    %s36 = sld [smem:[#allocation2 + $0x1]]
    %s37 = sld [smem:[#allocation2 + $0x2]]
    %v38 = vld [vmem:[#allocation6] ss:$2 sm:$0xf]
    %s39 = scalar_lea.vmem [#allocation6], 1
    %v40 = vld [vmem:[%s39] ss:$2 sm:$0xf]
    %v41 = vstv %s35
    %v42 = vmul.f32 %v38, %v41
    %v43 = vstv %s36
    %v44 = vmul.f32 %v40, %v43
    %v45 = vadd.f32 %v42, %v44
    %v46 = vstv %s37
    %v47 = vadd.f32 %v45, %v46
    %v48 = vxor.u32 %v47, 2147483648
    %v49 = vmul.f32 %v48, 1.442695
    %v50 = vpow.pop %v49
    %v51 = vadd.f32 %v50, 1.0
    %v52 = vrcp.pop %v51
    %v53 = vmul.f32 1.0, %v52
    %v54 = vlaneseq
    %vm55 = vcmp.ge.s32.totalorder %v54, 0
    %vm56 = vcmp.lt.s32.totalorder %v54, 512
    %vm57 = vmand %vm55, %vm56
    %58 = vst.msk [vmem:[#allocation7] sm:$0xf] %vm57, %v53
    // Predicated region
    $region18: #{tpu_custom_call.1} parent=1 // pred_check
      _
    $region19: #{tpu_custom_call.1} parent=1 // pred_check_branch
      %60 = sbr.rel (0) target = $region21
    $region20: #{tpu_custom_call.1} parent=1 // pred_region
      %s62 = ssub.s32 64, 64
      %63 = vsyncadd [#allocation4], %s62
      %s65 = sshll.u32 [#allocation7], 4
      %s66 = int_to_ptr.vmem [resolvable:$true] %s65
      %68 = dma.vmem_to_hbm [thread:$0]  %s66, 64, %s2, [#allocation4]
    $region21: #{tpu_custom_call.1} parent=1 // pred_fallthru
      _
    // Predicated region
    $region22: #{tpu_custom_call.1} parent=1 // pred_check
      _
    $region23: #{tpu_custom_call.1} parent=1 // pred_check_branch
      %70 = sbr.rel (0) target = $region25
    $region24: #{tpu_custom_call.1} parent=1 // pred_region
      %71 = dma.done [#allocation4], 64
    $region25: #{tpu_custom_call.1} parent=1 // pred_fallthru
      _
    %72 = vsyncpa [#allocation3], 1
    %73 = vsyncpa [#allocation4], 1
    %74 = vsyncpa [#allocation5], 1

</llo_original>
